<compile_context>
chip_gen: v6e
topology: v6e:2x2x1
jax: 0.10.0
libtpu: 0.0.40
codegen_flags: <defaults>
</compile_context>

<pallas_src>
import math

import jax
import jax.numpy as jnp
from jax import lax
from jax.experimental import pallas as pl
from jax.experimental.pallas import tpu as pltpu

_VMEM_LIMIT = 32 * 1024 * 1024  # fits scoped VMEM on v5e/v6e/v7x


def _pick_tile(dim, pref, align):
    """Largest tile <= pref that divides `dim` and is a multiple of `align`;
    falls back to the full dim (full-extent blocks always satisfy (8,128))."""
    if dim <= pref:
        return dim
    t = (pref // align) * align
    while t >= align:
        if dim % t == 0:
            return t
        t -= align
    return dim


# ----------------------------- Linear kernels ------------------------------ #
def _linear_kernel(x_ref, w_ref, b_ref, o_ref, acc_ref):
    @pl.when(pl.program_id(2) == 0)
    def _():
        acc_ref[...] = jnp.zeros_like(acc_ref)

    acc_ref[...] += jnp.dot(x_ref[...], w_ref[...],
                            preferred_element_type=jnp.float32)

    @pl.when(pl.program_id(2) == pl.num_programs(2) - 1)
    def _():
        o_ref[...] = (acc_ref[...] + b_ref[...]).astype(o_ref.dtype)


def linear(x, w, b, *, out_dtype=jnp.bfloat16, tm=256, tn=256, tk=512):
    """x:(M,K) @ w:(K,N) + b:(N,), tiled + pipelined, f32 accumulation."""
    M, K = x.shape
    N = w.shape[1]
    tm = _pick_tile(M, tm, 8)
    tn = _pick_tile(N, tn, 128)
    tk = _pick_tile(K, tk, 128)
    b2 = b.reshape(1, N).astype(jnp.float32)
    return pl.pallas_call(
        _linear_kernel,
        out_shape=jax.ShapeDtypeStruct((M, N), out_dtype),
        grid_spec=pltpu.PrefetchScalarGridSpec(
            num_scalar_prefetch=0,
            grid=(M // tm, N // tn, K // tk),
            in_specs=[
                pl.BlockSpec((tm, tk), lambda i, j, k: (i, k)),
                pl.BlockSpec((tk, tn), lambda i, j, k: (k, j)),
                pl.BlockSpec((1, tn), lambda i, j, k: (0, j)),
            ],
            out_specs=pl.BlockSpec((tm, tn), lambda i, j, k: (i, j)),
            scratch_shapes=[pltpu.VMEM((tm, tn), jnp.float32)],
        ),
        compiler_params=pltpu.CompilerParams(
            dimension_semantics=("parallel", "parallel", "arbitrary"),
            vmem_limit_bytes=_VMEM_LIMIT,
        ),
    )(x, w, b2)


def _kv_linear_kernel(x_ref, wk_ref, wv_ref, bk_ref, bv_ref,
                      ko_ref, vo_ref, acck_ref, accv_ref):
    @pl.when(pl.program_id(2) == 0)
    def _():
        acck_ref[...] = jnp.zeros_like(acck_ref)
        accv_ref[...] = jnp.zeros_like(accv_ref)

    x = x_ref[...]  # load the shared context tile once, reuse for both matmuls
    acck_ref[...] += jnp.dot(x, wk_ref[...], preferred_element_type=jnp.float32)
    accv_ref[...] += jnp.dot(x, wv_ref[...], preferred_element_type=jnp.float32)

    @pl.when(pl.program_id(2) == pl.num_programs(2) - 1)
    def _():
        ko_ref[...] = (acck_ref[...] + bk_ref[...]).astype(ko_ref.dtype)
        vo_ref[...] = (accv_ref[...] + bv_ref[...]).astype(vo_ref.dtype)


def kv_linear(x, wk, wv, bk, bv, *, out_dtype=jnp.bfloat16, tm=256, tn=256, tk=512):
    """Fused K/V projections: context is DMA'd once for both matmuls."""
    M, K = x.shape
    N = wk.shape[1]
    tm = _pick_tile(M, tm, 8)
    tn = _pick_tile(N, tn, 128)
    tk = _pick_tile(K, tk, 128)
    bk2 = bk.reshape(1, N).astype(jnp.float32)
    bv2 = bv.reshape(1, N).astype(jnp.float32)
    return pl.pallas_call(
        _kv_linear_kernel,
        out_shape=(jax.ShapeDtypeStruct((M, N), out_dtype),
                   jax.ShapeDtypeStruct((M, N), out_dtype)),
        grid_spec=pltpu.PrefetchScalarGridSpec(
            num_scalar_prefetch=0,
            grid=(M // tm, N // tn, K // tk),
            in_specs=[
                pl.BlockSpec((tm, tk), lambda i, j, k: (i, k)),
                pl.BlockSpec((tk, tn), lambda i, j, k: (k, j)),
                pl.BlockSpec((tk, tn), lambda i, j, k: (k, j)),
                pl.BlockSpec((1, tn), lambda i, j, k: (0, j)),
                pl.BlockSpec((1, tn), lambda i, j, k: (0, j)),
            ],
            out_specs=(pl.BlockSpec((tm, tn), lambda i, j, k: (i, j)),
                       pl.BlockSpec((tm, tn), lambda i, j, k: (i, j))),
            scratch_shapes=[pltpu.VMEM((tm, tn), jnp.float32),
                            pltpu.VMEM((tm, tn), jnp.float32)],
        ),
        compiler_params=pltpu.CompilerParams(
            dimension_semantics=("parallel", "parallel", "arbitrary"),
            vmem_limit_bytes=_VMEM_LIMIT,
        ),
    )(x, wk, wv, bk2, bv2)


# --------------------------- Attention kernel ------------------------------ #
def _attn_body(q_ref, k_ref, v_ref, mask_ref, o_ref, num_heads, head_dim):
    # q: (tq, H*Dh) bf16 (already scaled by 1/sqrt(Dh)), k/v: (Sk, H*Dh) bf16
    # mask: (tq, Sk) f32 additive or None; o: (tq, H*Dh) f32 (lane-dense block)
    mask = mask_ref[...] if mask_ref is not None else None
    for h in range(num_heads):
        lo = h * head_dim
        hi = lo + head_dim
        q = q_ref[:, lo:hi]
        k = k_ref[:, lo:hi]
        v = v_ref[:, lo:hi]
        # scores = q @ k^T without materializing an explicit transpose of k
        scores = lax.dot_general(
            q, k, dimension_numbers=(((1,), (1,)), ((), ())),
            preferred_element_type=jnp.float32)
        if mask is not None:
            scores = scores + mask
        m = jnp.max(scores, axis=-1, keepdims=True)
        e = jnp.exp(scores - m)
        denom = jnp.sum(e, axis=-1, keepdims=True)
        probs = e * pl.reciprocal(denom, approx=True)
        # dropout on probs: identity at inference.
        out_h = jnp.dot(probs.astype(v.dtype), v,
                        preferred_element_type=jnp.float32)
        o_ref[:, lo:hi] = out_h.astype(o_ref.dtype)


def _attn_kernel_masked(num_heads, head_dim):
    def kernel(q_ref, k_ref, v_ref, mask_ref, o_ref):
        _attn_body(q_ref, k_ref, v_ref, mask_ref, o_ref, num_heads, head_dim)
    return kernel


def _attn_kernel_nomask(num_heads, head_dim):
    def kernel(q_ref, k_ref, v_ref, o_ref):
        _attn_body(q_ref, k_ref, v_ref, None, o_ref, num_heads, head_dim)
    return kernel


def attention(q, k, v, mask, num_heads, *, out_dtype=jnp.float32, tq=512):
    """q:(B,Sq,H*Dh), k/v:(B,Sk,H*Dh) (bf16), mask additive (B,1,Sq,Sk) f32 or None.
    Returns (B, Sq, H*Dh) in out_dtype — already the final [B, seq, all_head_size]
    layout, so no wrapper transposes are needed."""
    B, Sq, HD = q.shape
    Sk = k.shape[1]
    Dh = HD // num_heads
    tq = _pick_tile(Sq, tq, 8)
    grid = (B, Sq // tq)

    in_specs = [
        pl.BlockSpec((None, tq, HD), lambda b, qi: (b, qi, 0)),
        pl.BlockSpec((None, Sk, HD), lambda b, qi: (b, 0, 0)),
        pl.BlockSpec((None, Sk, HD), lambda b, qi: (b, 0, 0)),
    ]
    if mask is not None:
        in_specs.append(
            pl.BlockSpec((None, None, tq, Sk), lambda b, qi: (b, 0, qi, 0)))
        kernel = _attn_kernel_masked(num_heads, Dh)
        args = (q, k, v, mask)
    else:
        kernel = _attn_kernel_nomask(num_heads, Dh)
        args = (q, k, v)

    return pl.pallas_call(
        kernel,
        out_shape=jax.ShapeDtypeStruct((B, Sq, HD), out_dtype),
        grid=grid,
        in_specs=in_specs,
        out_specs=pl.BlockSpec((None, tq, HD), lambda b, qi: (b, qi, 0)),
        compiler_params=pltpu.CompilerParams(
            dimension_semantics=("parallel", "parallel"),
            vmem_limit_bytes=_VMEM_LIMIT,
        ),
    )(*args)


# --------------------------- Module wrapper -------------------------------- #
class BertOutAttentionPallas:
    def __init__(self, hidden_size, num_heads, ctx_dim=None, key=None,
                 compute_dtype=jnp.bfloat16):
        if hidden_size % num_heads != 0:
            raise ValueError("hidden_size must be divisible by num_heads")
        self.num_heads = num_heads
        self.head_dim = hidden_size // num_heads
        self.all_head_size = hidden_size
        self.compute_dtype = compute_dtype
        if ctx_dim is None:
            ctx_dim = hidden_size
        if key is None:
            key = jax.random.PRNGKey(0)
        kq, kk, kv, bq, bk, bv = jax.random.split(key, 6)
        s = 0.02
        # canonical f32 params, stored (in_dim, out_dim) == nn.Linear.weight.T
        self.wq = s * jax.random.normal(kq, (hidden_size, hidden_size), jnp.float32)
        self.wk = s * jax.random.normal(kk, (ctx_dim, hidden_size), jnp.float32)
        self.wv = s * jax.random.normal(kv, (ctx_dim, hidden_size), jnp.float32)
        self.bq = s * jax.random.normal(bq, (hidden_size,), jnp.float32)
        self.bk = s * jax.random.normal(bk, (hidden_size,), jnp.float32)
        self.bv = s * jax.random.normal(bv, (hidden_size,), jnp.float32)

        # compute-time copies: 1/sqrt(Dh) folded into the query projection,
        # MXU operands pre-cast to bf16 (f32 accumulation happens in-kernel).
        scale = 1.0 / math.sqrt(self.head_dim)
        self._wq_c = (self.wq * scale).astype(compute_dtype)
        self._bq_c = (self.bq * scale).astype(jnp.float32)
        self._wk_c = self.wk.astype(compute_dtype)
        self._wv_c = self.wv.astype(compute_dtype)

    def __call__(self, hidden_states, context, attention_mask=None):
        B, Sq, D = hidden_states.shape
        _, Sk, Dc = context.shape
        cd = self.compute_dtype

        x_q = hidden_states.reshape(B * Sq, D).astype(cd)
        x_kv = context.reshape(B * Sk, Dc).astype(cd)

        # projections (Q separately; K and V fused so `context` is read once)
        q = linear(x_q, self._wq_c, self._bq_c, out_dtype=cd)          # pre-scaled
        k, v = kv_linear(x_kv, self._wk_c, self._wv_c, self.bk, self.bv,
                         out_dtype=cd)

        # stay in [B, S, H*Dh] layout — heads are split inside the kernel,
        # so no (B,S,H,Dh)->(B,H,S,Dh) transposes / HBM round trips.
        q = q.reshape(B, Sq, self.all_head_size)
        k = k.reshape(B, Sk, self.all_head_size)
        v = v.reshape(B, Sk, self.all_head_size)

        if attention_mask is not None:
            attention_mask = attention_mask.astype(jnp.float32)

        return attention(q, k, v, attention_mask, self.num_heads,
                         out_dtype=jnp.float32)


# ------------------------------ Reference ---------------------------------- #
def reference(mod, hidden_states, context, attention_mask):
    B, Sq, D = hidden_states.shape
    _, Sk, _ = context.shape
    H, Dh = mod.num_heads, mod.head_dim
    q = hidden_states @ mod.wq + mod.bq
    k = context @ mod.wk + mod.bk
    v = context @ mod.wv + mod.bv
    q = q.reshape(B, Sq, H, Dh).transpose(0, 2, 1, 3)
    k = k.reshape(B, Sk, H, Dh).transpose(0, 2, 1, 3)
    v = v.reshape(B, Sk, H, Dh).transpose(0, 2, 1, 3)
    s = jnp.einsum("bhqd,bhkd->bhqk", q, k) / math.sqrt(Dh)
    if attention_mask is not None:
        s = s + attention_mask
    p = jax.nn.softmax(s, axis=-1)
    o = jnp.einsum("bhqk,bhkd->bhqd", p, v)
    return o.transpose(0, 2, 1, 3).reshape(B, Sq, H * Dh)


if __name__ == "__main__":
    B, Sq, Sk, hidden, heads = 2, 8, 16, 32, 4
    key = jax.random.PRNGKey(0)
    k1, k2, kw = jax.random.split(key, 3)

    hidden_states = jax.random.normal(k1, (B, Sq, hidden), jnp.float32)
    context = jax.random.normal(k2, (B, Sk, hidden), jnp.float32)
    # additive mask: 0 = keep, -1e9 = masked (mask out last 4 context positions of batch 1)
    mask = jnp.zeros((B, 1, Sq, Sk), jnp.float32)
    mask = mask.at[1, :, :, -4:].set(-1e9)

    mod = BertOutAttentionPallas(hidden, heads, ctx_dim=hidden, key=kw)

    # masked path
    out = jax.block_until_ready(mod(hidden_states, context, mask))
    ref = reference(mod, hidden_states, context, mask)
    assert out.shape == (B, Sq, hidden), out.shape
    err = float(jnp.max(jnp.abs(out - ref)))
    assert jnp.allclose(out, ref, atol=1e-2, rtol=1e-2), err  # bf16 MXU tolerance

    # no-mask path (mask input is skipped entirely, no zero tensor fabricated)
    out2 = jax.block_until_ready(mod(hidden_states, context, None))
    ref2 = reference(mod, hidden_states, context, None)
    err2 = float(jnp.max(jnp.abs(out2 - ref2)))
    assert jnp.allclose(out2, ref2, atol=1e-2, rtol=1e-2), err2

    print("KERNEL_OK")
</pallas_src>

<mosaic_0001>
module attributes {stable_mosaic.version = 11 : i64} {
  func.func @_linear_kernel(%arg0: i32, %arg1: i32, %arg2: i32, %arg3: memref<16x32xbf16, #tpu.memory_space<vmem>>, %arg4: memref<32x32xbf16, #tpu.memory_space<vmem>>, %arg5: memref<1x32xf32, #tpu.memory_space<vmem>>, %arg6: memref<16x32xbf16, #tpu.memory_space<vmem>>, %arg7: memref<16x32xf32, #tpu.memory_space<vmem>>) attributes {dimension_semantics = [#tpu.dimension_semantics<parallel>, #tpu.dimension_semantics<parallel>, #tpu.dimension_semantics<arbitrary>], iteration_bounds = array<i64: 1, 1, 1>, scalar_prefetch = 0 : i64, scratch_operands = 1 : i64, tpu.core_type = #tpu.core_type<tc>, window_params = [{transform_indices = @transform_0, window_bounds = array<i64: 16, 32>}, {transform_indices = @transform_1, window_bounds = array<i64: 32, 32>}, {transform_indices = @transform_2, window_bounds = array<i64: 1, 32>}, {transform_indices = @transform_3, window_bounds = array<i64: 16, 32>}]} {
    %c0_i32 = arith.constant 0 : i32
    %0 = arith.cmpi eq, %arg2, %c0_i32 : i32
    %1 = arith.extui %0 : i1 to i32
    %c0_i32_0 = arith.constant 0 : i32
    %2 = arith.cmpi ne, %1, %c0_i32_0 : i32
    scf.if %2 {
      %cst_10 = arith.constant 0.000000e+00 : f32
      %12 = vector.broadcast %cst_10 : f32 to vector<16x32xf32>
      %c0_11 = arith.constant 0 : index
      %c0_12 = arith.constant 0 : index
      %13 = vector.load %arg7[%c0_11, %c0_12] : memref<16x32xf32, #tpu.memory_space<vmem>>, vector<16x32xf32>
      tpu.vector_store %arg7[%c0_11, %c0_12], %12 {strides = array<i32>} : memref<16x32xf32, #tpu.memory_space<vmem>>, vector<16x32xf32>,
    } else {
    }
    %c0 = arith.constant 0 : index
    %c0_1 = arith.constant 0 : index
    %3 = vector.load %arg7[%c0, %c0_1] : memref<16x32xf32, #tpu.memory_space<vmem>>, vector<16x32xf32>
    %c0_2 = arith.constant 0 : index
    %c0_3 = arith.constant 0 : index
    %4 = vector.load %arg3[%c0_2, %c0_3] : memref<16x32xbf16, #tpu.memory_space<vmem>>, vector<16x32xbf16>
    %c0_4 = arith.constant 0 : index
    %c0_5 = arith.constant 0 : index
    %5 = vector.load %arg4[%c0_4, %c0_5] : memref<32x32xbf16, #tpu.memory_space<vmem>>, vector<32x32xbf16>
    %cst = arith.constant dense<0.000000e+00> : vector<16x32xf32>
    %6 = tpu.matmul %4, %5, %cst {dimension_numbers = #tpu.dot_dimension_numbers<[1], [0], [0], [1], [0, 0, 1, 1], [], []>} : vector<16x32xbf16>, vector<32x32xbf16>, vector<16x32xf32> -> vector<16x32xf32>
    %7 = arith.addf %3, %6 : vector<16x32xf32>
    %c0_6 = arith.constant 0 : index
    %c0_7 = arith.constant 0 : index
    %8 = vector.load %arg7[%c0_6, %c0_7] : memref<16x32xf32, #tpu.memory_space<vmem>>, vector<16x32xf32>
    tpu.vector_store %arg7[%c0_6, %c0_7], %7 {strides = array<i32>} : memref<16x32xf32, #tpu.memory_space<vmem>>, vector<16x32xf32>,
    %c0_i32_8 = arith.constant 0 : i32
    %9 = arith.cmpi eq, %arg2, %c0_i32_8 : i32
    %10 = arith.extui %9 : i1 to i32
    %c0_i32_9 = arith.constant 0 : i32
    %11 = arith.cmpi ne, %10, %c0_i32_9 : i32
    scf.if %11 {
      %c0_10 = arith.constant 0 : index
      %c0_11 = arith.constant 0 : index
      %12 = vector.load %arg7[%c0_10, %c0_11] : memref<16x32xf32, #tpu.memory_space<vmem>>, vector<16x32xf32>
      %c0_12 = arith.constant 0 : index
      %c0_13 = arith.constant 0 : index
      %13 = vector.load %arg5[%c0_12, %c0_13] : memref<1x32xf32, #tpu.memory_space<vmem>>, vector<1x32xf32>
      %14 = vector.broadcast %13 : vector<1x32xf32> to vector<16x32xf32>
      %15 = arith.addf %12, %14 : vector<16x32xf32>
      %16 = arith.truncf %15 : vector<16x32xf32> to vector<16x32xbf16>
      %c0_14 = arith.constant 0 : index
      %c0_15 = arith.constant 0 : index
      %17 = vector.load %arg6[%c0_14, %c0_15] : memref<16x32xbf16, #tpu.memory_space<vmem>>, vector<16x32xbf16>
      tpu.vector_store %arg6[%c0_14, %c0_15], %16 {strides = array<i32>} : memref<16x32xbf16, #tpu.memory_space<vmem>>, vector<16x32xbf16>,
    } else {
    }
    return
  }
  func.func @transform_0(%arg0: i32, %arg1: i32, %arg2: i32) -> (i32, i32) {
    %c0_i32 = arith.constant 0 : i32
    return %arg0, %arg2 : i32, i32
  }
  func.func @transform_1(%arg0: i32, %arg1: i32, %arg2: i32) -> (i32, i32) {
    %c0_i32 = arith.constant 0 : i32
    return %arg2, %arg1 : i32, i32
  }
  func.func @transform_2(%arg0: i32, %arg1: i32, %arg2: i32) -> (i32, i32) {
    %c0_i32 = arith.constant 0 : i32
    %c0_i32_0 = arith.constant 0 : i32
    return %c0_i32, %arg1 : i32, i32
  }
  func.func @transform_3(%arg0: i32, %arg1: i32, %arg2: i32) -> (i32, i32) {
    %c0_i32 = arith.constant 0 : i32
    return %arg0, %arg1 : i32, i32
  }
}

</mosaic_0001>

<llo_original>
// kernel: tpu_custom_call.1
$region0: #{tpu_custom_call.1}
  #allocation0 [shape = 'u32[]', space=smem, size = 0x4, offset = 0x4, fixed_abs, tag = 'smem constant byte address 0x4 - core index']
  #allocation1 [shape = 'u32[144,128]{1,0:T(1,128)}', space=vmem, size = 0x12000, scoped, tag = 'internal scratch']
  #allocation2 [shape = 'f32[16,32]{1,0:T(8,128)}', space=vmem, size = 0x2000, scoped, tag = 'scratch operand']
  %s0 = inlined_call_operand.hbm [shape: bf16[16,32], index: 0, kind: input, shape index: {}]
  %s1 = inlined_call_operand.hbm [shape: bf16[32,32], index: 1, kind: input, shape index: {}]
  %s2 = inlined_call_operand.vmem [shape: f32[1,32], index: 2, kind: input, shape index: {}]
  %s3 = inlined_call_operand.hbm [shape: bf16[16,32], index: 3, kind: output, shape index: {}]
  %s4 = sld [smem:[#allocation0]]
  $region38: #{tpu_custom_call.1} parent=0
    _
  %s6 = ssub.s32 1, %s4
  %s7 = scalar_select 0, %s6, %s4
  $region1: #{tpu_custom_call.1} parent=0
    #allocation3 [shape = 'u8[4096]{0}', space=vmem, size = 0x1000, scoped, tag = 'input window, operand 0, single buffered']
    #allocation4 [shape = 's32[1]{0}', space=sflag, size = 0x4, scoped, tag = 'scoped memory for tpu_custom_call.1']
    #allocation5 [shape = 's32[1]{0}', space=sflag, size = 0x4, scoped, tag = 'scoped memory for tpu_custom_call.1']
    #allocation6 [shape = 'u8[8192]{0}', space=vmem, size = 0x2000, scoped, tag = 'input window, operand 1, single buffered']
    #allocation7 [shape = 's32[1]{0}', space=sflag, size = 0x4, scoped, tag = 'scoped memory for tpu_custom_call.1']
    #allocation8 [shape = 'u8[4096]{0}', space=vmem, size = 0x1000, scoped, tag = 'output window, operand 0, single buffered']
    %8 = vsyncpa [#allocation4], 0
    %9 = vsyncpa [#allocation7], 0
    %10 = vsyncpa [#allocation5], 0
    // Predicated region
    $region2: #{tpu_custom_call.1} parent=1 // pred_check
      _
    $region3: #{tpu_custom_call.1} parent=1 // pred_check_branch
      %12 = sbr.rel (0) target = $region5
    $region4: #{tpu_custom_call.1} parent=1 // pred_region
      %s14 = ssub.s32 128, 128
      %15 = vsyncadd [#allocation4], %s14
      %s16 = sshll.u32 [#allocation3], 4
      %s17 = int_to_ptr.vmem [resolvable:$true] %s16
      %22 = dma.hbm_to_vmem [thread:$0]  %s0, 128, %s17, [#allocation4], 64, 64, 4
    $region5: #{tpu_custom_call.1} parent=1 // pred_fallthru
      _
    // Predicated region
    $region6: #{tpu_custom_call.1} parent=1 // pred_check
      _
    $region7: #{tpu_custom_call.1} parent=1 // pred_check_branch
      %24 = sbr.rel (0) target = $region9
    $region8: #{tpu_custom_call.1} parent=1 // pred_region
      %s26 = ssub.s32 256, 256
      %27 = vsyncadd [#allocation7], %s26
      %s28 = sshll.u32 [#allocation6], 4
      %s29 = int_to_ptr.vmem [resolvable:$true] %s28
      %34 = dma.hbm_to_vmem [thread:$0]  %s1, 256, %s29, [#allocation7], 64, 64, 4
    $region9: #{tpu_custom_call.1} parent=1 // pred_fallthru
      _
    // Predicated region
    $region10: #{tpu_custom_call.1} parent=1 // pred_check
      _
    $region11: #{tpu_custom_call.1} parent=1 // pred_check_branch
      %36 = sbr.rel (0) target = $region13
    $region12: #{tpu_custom_call.1} parent=1 // pred_region
      _
    $region13: #{tpu_custom_call.1} parent=1 // pred_fallthru
      _
    // Predicated region
    $region14: #{tpu_custom_call.1} parent=1 // pred_check
      _
    $region15: #{tpu_custom_call.1} parent=1 // pred_check_branch
      %38 = sbr.rel (0) target = $region17
    $region16: #{tpu_custom_call.1} parent=1 // pred_region
      %39 = dma.done [#allocation4], 128
    $region17: #{tpu_custom_call.1} parent=1 // pred_fallthru
      _
    // Predicated region
    $region18: #{tpu_custom_call.1} parent=1 // pred_check
      _
    $region19: #{tpu_custom_call.1} parent=1 // pred_check_branch
      %41 = sbr.rel (0) target = $region21
    $region20: #{tpu_custom_call.1} parent=1 // pred_region
      %42 = dma.done [#allocation7], 256
    $region21: #{tpu_custom_call.1} parent=1 // pred_fallthru
      _
    %p44 = scmp.eq.s32.totalorder 0, 0
    // Predicated region
    $region22: #{tpu_custom_call.1} parent=1 // pred_check
      %p45 = pneg %p44
    $region23: #{tpu_custom_call.1} parent=1 // pred_check_branch
      %47 = sbr.rel (%p45) target = $region25
    $region24: #{tpu_custom_call.1} parent=1 // pred_region
      %vm48 = vcmask 261120
      %49 = vst.msk [vmem:[#allocation2] sm:$0xff] %vm48, 0.0
      %50 = vst.msk [vmem:[#allocation2 + $0x8] sm:$0xff] %vm48, 0.0
    $region25: #{tpu_custom_call.1} parent=1 // pred_fallthru
      _
    %v51 = vld [vmem:[#allocation2] sm:$0xff]
    %v52 = vld [vmem:[#allocation2 + $0x8] sm:$0xff]
    %v53 = vld [vmem:[#allocation3] sm:$0xf]
    %v54 = vld [vmem:[#allocation3 + $0x4] sm:$0xf]
    %v55 = vld [vmem:[#allocation6] sm:$0xf]
    %v56 = vld [vmem:[#allocation6 + $0x4] sm:$0xf]
    %v57 = vld [vmem:[#allocation6 + $0x8] sm:$0xf]
    %v58 = vld [vmem:[#allocation6 + $0xc] sm:$0xf]
    %v61 = vunpack.c.l.b16 %v53
    %v62 = vunpack.c.l.b16 %v54
    %v63 = vpack.c.b16 %v62, %v61
    %v68 = vunpack.c.l.b16 %v55
    %v69 = vunpack.c.l.b16 %v56
    %v70 = vunpack.c.l.b16 %v57
    %v71 = vunpack.c.l.b16 %v58
    %v72 = vpack.c.b16 %v69, %v68
    %v73 = vpack.c.b16 %v71, %v70
    %vm76 = vcmask 261120
    %v78 = vsel %vm76, %v63, 0
    %80 = vmatprep.subr.bf16.mxu0 0
    %81 = vmatpush1.bf16.msra.mxu0 0
    %82 = vmatprep.subr.bf16.mxu0 0
    %83 = vmatpush1.bf16.msra.mxu0 0
    %84 = vmatprep.subr.bf16.mxu0 0
    %85 = vmatpush1.bf16.msra.mxu0 0
    %86 = vmatprep.subr.bf16.mxu0 0
    %87 = vmatpush1.bf16.msra.mxu0 0
    %88 = vmatprep.subr.bf16.mxu0 0
    %89 = vmatpush1.bf16.msra.mxu0 0
    %90 = vmatprep.subr.bf16.mxu0 0
    %91 = vmatpush1.bf16.msra.mxu0 0
    %92 = vmatprep.subr.bf16.mxu0 0
    %93 = vmatpush1.bf16.msra.mxu0 %v73
    %94 = vmatprep.subr.bf16.mxu0 0
    %95 = vmatpush1.bf16.msra.mxu0 %v72
    %96 = vmatprep.subr.bf16.mxu0 0
    %97 = vmatpush2.bf16.msra.mxu0 0
    %98 = vmatprep.subr.bf16.mxu0 0
    %99 = vmatpush2.bf16.msra.mxu0 0
    %100 = vmatprep.subr.bf16.mxu0 0
    %101 = vmatpush2.bf16.msra.mxu0 0
    %102 = vmatprep.subr.bf16.mxu0 0
    %103 = vmatpush2.bf16.msra.mxu0 0
    %104 = vmatprep.subr.bf16.mxu0 0
    %105 = vmatpush2.bf16.msra.mxu0 0
    %106 = vmatprep.subr.bf16.mxu0 0
    %107 = vmatpush2.bf16.msra.mxu0 0
    %108 = vmatprep.subr.bf16.mxu0 0
    %109 = vmatpush2.bf16.msra.mxu0 0
    %110 = vmatprep.subr.bf16.mxu0 0
    %111 = vmatpush2.bf16.msra.mxu0 0
    %112 = vmatprep.mubr.bf16.mxu0 0
    %113 = vmatmul.mubr.bf16.gmra.mxu0 %v78
    %v114 = vpop.f32.mrf.mxu0
    %v115 = vadd.f32 0.0, %v114
    %v116 = vpop.f32.mrf.mxu0
    %v117 = vpop.f32.mrf.mxu0
    %v118 = vadd.f32 0.0, %v117
    %v119 = vpop.f32.mrf.mxu0
    %120 = vdwg.mxu0
    %v121 = vadd.f32 %v51, %v115
    %v122 = vadd.f32 %v52, %v118
    %123 = vst.msk [vmem:[#allocation2] sm:$0xff] %vm76, %v121
    %124 = vst.msk [vmem:[#allocation2 + $0x8] sm:$0xff] %vm76, %v122
    // Predicated region
    $region26: #{tpu_custom_call.1} parent=1 // pred_check
      %p125 = pneg %p44
    $region27: #{tpu_custom_call.1} parent=1 // pred_check_branch
      %127 = sbr.rel (%p125) target = $region29
    $region28: #{tpu_custom_call.1} parent=1 // pred_region
      %v128 = vld [vmem:[#allocation2] sm:$0xff]
      %v129 = vld [vmem:[#allocation2 + $0x8] sm:$0xff]
      %v130 = vld [vmem:[%s2] sm:$0x1]
      %v132 = vlaneseq
      %v133 = vshrl.u32 %v132, 7
      %v134 = vsub.s32 0, %v133
      %v135 = vrot.slane %v130, %v134
      %v137 = vadd.f32 %v128, %v135
      %v138 = vadd.f32 %v129, %v135
      %v139 = vpack.c.bf16 %v138, %v137
      %v141 = vunpack.c.l.b16 %v139
      %v142 = vunpack.c.h.b16 %v139
      %v143 = vpack.c.b16 %v141, %v141
      %v144 = vpack.c.b16 %v142, %v142
      %vm147 = vcmask 257024
      %148 = vst.msk [vmem:[#allocation8] sm:$0xf] %vm147, %v143
      %149 = vst.msk [vmem:[#allocation8 + $0x4] sm:$0xf] %vm147, %v144
    $region29: #{tpu_custom_call.1} parent=1 // pred_fallthru
      _
    // Predicated region
    $region30: #{tpu_custom_call.1} parent=1 // pred_check
      _
    $region31: #{tpu_custom_call.1} parent=1 // pred_check_branch
      %151 = sbr.rel (0) target = $region33
    $region32: #{tpu_custom_call.1} parent=1 // pred_region
      %s153 = ssub.s32 128, 128
      %154 = vsyncadd [#allocation5], %s153
      %s155 = sshll.u32 [#allocation8], 4
      %s156 = int_to_ptr.vmem [resolvable:$true] %s155
      %161 = dma.vmem_to_hbm [thread:$0]  %s156, 128, %s3, [#allocation5], 64, 64, 4
    $region33: #{tpu_custom_call.1} parent=1 // pred_fallthru
      _
    // Predicated region
    $region34: #{tpu_custom_call.1} parent=1 // pred_check
      _
    $region35: #{tpu_custom_call.1} parent=1 // pred_check_branch
      %163 = sbr.rel (0) target = $region37
    $region36: #{tpu_custom_call.1} parent=1 // pred_region
      %164 = dma.done [#allocation5], 128
    $region37: #{tpu_custom_call.1} parent=1 // pred_fallthru
      _
    %165 = vsyncpa [#allocation4], 1
    %166 = vsyncpa [#allocation7], 1
    %167 = vsyncpa [#allocation5], 1

</llo_original>
